<compile_context>
chip_gen: v5e
topology: v5e:2x2
jax: 0.10.0
libtpu: 0.0.40
codegen_flags: <defaults>
</compile_context>

<pallas_src>
import functools

import jax
import jax.numpy as jnp
from jax import lax
from jax.experimental import pallas as pl
from jax.experimental.pallas import tpu as pltpu


def critic_kernel(x_ref, w1_ref, b1_ref, w2_ref, b2_ref, w3_ref, b3_ref, o_ref, *, bf16_act):
    """Fused 3-layer MLP critic; batch-on-lanes intermediates.

    x_ref : [block_b, in_dim]  f32   (natural layout; cast to bf16 in-kernel)
    w1    : [hidden, in_dim]   bf16  (torch [out, in] orientation, pre-cast)
    b1    : [hidden, 1]        f32
    w2    : [hidden, hidden]   bf16
    b2    : [hidden, 1]        f32
    w3    : [hidden, 1]        f32
    b3    : [1]                f32   (SMEM scalar)
    o_ref : [1, block_b]       f32   (lane-dense row of critic values)
    """
    act_dtype = jnp.bfloat16 if bf16_act else jnp.float32

    x = x_ref[...].astype(jnp.bfloat16)                        # [block_b, in_dim]

    # Layer 1: contract in_dim -> [hidden, block_b] (batch on lanes), f32 accumulation.
    h1 = jnp.tanh(
        (lax.dot_general(w1_ref[...], x,
                         dimension_numbers=(((1,), (1,)), ((), ())),
                         preferred_element_type=jnp.float32)
         + b1_ref[...]).astype(act_dtype))                      # [hidden, block_b]

    # Layer 2: [hidden, hidden] x [hidden, block_b] -> [hidden, block_b].
    h2 = jnp.tanh(
        (jnp.dot(w2_ref[...], h1.astype(jnp.bfloat16),
                 preferred_element_type=jnp.float32)
         + b2_ref[...]).astype(act_dtype))                      # [hidden, block_b]

    # Layer 3 (hidden -> 1): VPU multiply + sublane (XLU) reduce -> lane-dense (1, block_b).
    o_ref[...] = (jnp.sum(w3_ref[...] * h2.astype(jnp.float32), axis=0, keepdims=True)
                  + b3_ref[0])


def _round_up(n, m):
    return ((n + m - 1) // m) * m


def _pick_block_b(batch):
    """~ceil(B/2) rounded up to 128, clamped to [128, 1024]: big tiles, grid >= 2 when possible."""
    target = _round_up(max(1, (batch + 1) // 2), 128)
    return int(min(1024, max(128, target)))


def _default_bf16_act():
    """bf16 tanh on v6e/v7x (bf16 EUP); f32 elsewhere (v5e and older have no bf16 VPU/EUP)."""
    try:
        kind = jax.devices()[0].device_kind.lower()
    except Exception:
        return False
    return ("v6" in kind) or ("v7" in kind)


@functools.partial(jax.jit, static_argnames=("block_b", "bf16_act"))
def _critic_forward(x, w1, b1, w2, b2, w3, b3, *, block_b, bf16_act):
    B, in_dim = x.shape
    hidden = w1.shape[0]

    num_blocks = pl.cdiv(B, block_b)
    B_pad = num_blocks * block_b
    if B_pad != B:
        x = jnp.pad(x, ((0, B_pad - B), (0, 0)))   # only pad ragged batches (zeros -> discarded)

    # Pre-cast the tiny, grid-resident MXU weights once per call (not per grid step).
    w1_bf = w1.astype(jnp.bfloat16)
    w2_bf = w2.astype(jnp.bfloat16)

    flops = 2 * B_pad * (in_dim * hidden + hidden * hidden + hidden)
    transcendentals = 2 * B_pad * hidden
    bytes_accessed = (B_pad * in_dim * 4 + B_pad * 4            # x in, values out
                      + hidden * in_dim * 2 + hidden * hidden * 2  # bf16 weights
                      + 3 * hidden * 4 + 4)                        # biases + w3 + b3

    out_row = pl.pallas_call(
        functools.partial(critic_kernel, bf16_act=bf16_act),
        out_shape=jax.ShapeDtypeStruct((1, B_pad), jnp.float32),
        grid_spec=pltpu.PrefetchScalarGridSpec(
            num_scalar_prefetch=0,
            grid=(num_blocks,),
            in_specs=[
                pl.BlockSpec((block_b, in_dim), lambda i: (i, 0)),   # x tile, natural layout
                pl.BlockSpec((hidden, in_dim), lambda i: (0, 0)),    # W1 bf16 (resident)
                pl.BlockSpec((hidden, 1), lambda i: (0, 0)),         # b1 column
                pl.BlockSpec((hidden, hidden), lambda i: (0, 0)),    # W2 bf16 (resident)
                pl.BlockSpec((hidden, 1), lambda i: (0, 0)),         # b2 column
                pl.BlockSpec((hidden, 1), lambda i: (0, 0)),         # w3 column
                pl.BlockSpec(memory_space=pltpu.MemorySpace.SMEM),   # b3 scalar in SMEM
            ],
            out_specs=pl.BlockSpec((1, block_b), lambda i: (0, i)),  # lane-dense output slab
        ),
        compiler_params=pltpu.CompilerParams(
            dimension_semantics=("parallel",),
        ),
        cost_estimate=pl.CostEstimate(
            flops=flops,
            transcendentals=transcendentals,
            bytes_accessed=bytes_accessed,
        ),
    )(x, w1_bf, b1, w2_bf, b2, w3, b3)

    return out_row[0, :B].reshape(B, 1)


def decentralized_critic_forward(x, w1, b1, w2, b2, w3, b3, *, block_b=None, bf16_act=None):
    """x: [B, in_dim] f32. Weights in torch [out, in] orientation. Returns [B, 1] f32."""
    if block_b is None:
        block_b = _pick_block_b(x.shape[0])
    if bf16_act is None:
        bf16_act = _default_bf16_act()
    return _critic_forward(x, w1, b1, w2, b2, w3, b3, block_b=block_b, bf16_act=bf16_act)


def make_params(key, in_dim, hidden_dim=64):
    """Mirror layer_init: orthogonal weights (std sqrt(2), last layer std 1), zero biases.

    Weights kept in torch [out, in] orientation; w3 stored as a [hidden, 1] column.
    """
    k1, k2, k3 = jax.random.split(key, 3)
    ortho_sqrt2 = jax.nn.initializers.orthogonal(scale=float(jnp.sqrt(2.0)))
    ortho_1 = jax.nn.initializers.orthogonal(scale=1.0)

    w1 = ortho_sqrt2(k1, (hidden_dim, in_dim), jnp.float32)     # [H, in]
    b1 = jnp.zeros((hidden_dim, 1), jnp.float32)
    w2 = ortho_sqrt2(k2, (hidden_dim, hidden_dim), jnp.float32)
    b2 = jnp.zeros((hidden_dim, 1), jnp.float32)
    w3 = ortho_1(k3, (1, hidden_dim), jnp.float32).T            # [H, 1]
    b3 = jnp.zeros((1,), jnp.float32)
    return w1, b1, w2, b2, w3, b3


def reference_forward_f32(x, w1, b1, w2, b2, w3, b3):
    """Pure fp32 reference matching the PyTorch module semantics exactly."""
    h1 = jnp.tanh(x @ w1.T + b1.T)
    h2 = jnp.tanh(h1 @ w2.T + b2.T)
    return h2 @ w3 + b3


def reference_forward_matched(x, w1, b1, w2, b2, w3, b3, *, bf16_act):
    """Reference mirroring the kernel's precision path (bf16 matmuls, f32 accumulate)."""
    act = jnp.bfloat16 if bf16_act else jnp.float32
    xb = x.astype(jnp.bfloat16)
    h1 = jnp.tanh(
        (jnp.dot(xb, w1.T.astype(jnp.bfloat16), preferred_element_type=jnp.float32)
         + b1.T).astype(act))
    h2 = jnp.tanh(
        (jnp.dot(h1.astype(jnp.bfloat16), w2.T.astype(jnp.bfloat16),
                 preferred_element_type=jnp.float32)
         + b2.T).astype(act))
    return jnp.sum(h2.astype(jnp.float32) * w3.T, axis=-1, keepdims=True) + b3


if __name__ == "__main__":
    key = jax.random.PRNGKey(0)
    kx, kp = jax.random.split(key)

    # Small shapes consistent with the module: flattened obs dim 16, hidden 64, batch 8.
    batch, in_dim, hidden_dim = 8, 16, 64
    x = jax.random.normal(kx, (batch, in_dim), jnp.float32)
    params = make_params(kp, in_dim, hidden_dim)

    bf16_act = _default_bf16_act()

    out = jax.block_until_ready(decentralized_critic_forward(x, *params))
    assert out.shape == (batch, 1) and out.dtype == jnp.float32

    ref_matched = reference_forward_matched(x, *params, bf16_act=bf16_act)
    ref_f32 = reference_forward_f32(x, *params)
    assert jnp.allclose(out, ref_matched, atol=2e-2, rtol=2e-2), "mismatch vs precision-matched ref"
    assert jnp.allclose(out, ref_f32, atol=1e-1, rtol=1e-1), "mismatch vs fp32 module semantics"

    # Ragged batch (exercises the wrapper zero-pad path and the tail slice).
    x_ragged = jax.random.normal(kx, (37, in_dim), jnp.float32)
    out_ragged = jax.block_until_ready(decentralized_critic_forward(x_ragged, *params))
    assert out_ragged.shape == (37, 1)
    assert jnp.allclose(
        out_ragged,
        reference_forward_matched(x_ragged, *params, bf16_act=bf16_act),
        atol=2e-2, rtol=2e-2), "ragged-batch mismatch"

    print("KERNEL_OK")
</pallas_src>

<mosaic_0001>
module attributes {stable_mosaic.version = 11 : i64} {
  func.func @critic_kernel(%arg0: i32, %arg1: memref<128x16xf32, #tpu.memory_space<vmem>>, %arg2: memref<64x16xbf16, #tpu.memory_space<vmem>>, %arg3: memref<64x1xf32, #tpu.memory_space<vmem>>, %arg4: memref<64x64xbf16, #tpu.memory_space<vmem>>, %arg5: memref<64x1xf32, #tpu.memory_space<vmem>>, %arg6: memref<64x1xf32, #tpu.memory_space<vmem>>, %arg7: memref<1xf32, #tpu.memory_space<smem>>, %arg8: memref<1x128xf32, #tpu.memory_space<vmem>>) attributes {dimension_semantics = [#tpu.dimension_semantics<parallel>], iteration_bounds = array<i64: 1>, scalar_prefetch = 0 : i64, scratch_operands = 0 : i64, tpu.core_type = #tpu.core_type<tc>, window_params = [{transform_indices = @transform_0, window_bounds = array<i64: 128, 16>}, {pipeline_mode = #tpu.pipeline_mode<synchronous>, transform_indices = @transform_1, window_bounds = array<i64: 64, 16>}, {pipeline_mode = #tpu.pipeline_mode<synchronous>, transform_indices = @transform_2, window_bounds = array<i64: 64, 1>}, {pipeline_mode = #tpu.pipeline_mode<synchronous>, transform_indices = @transform_3, window_bounds = array<i64: 64, 64>}, {pipeline_mode = #tpu.pipeline_mode<synchronous>, transform_indices = @transform_4, window_bounds = array<i64: 64, 1>}, {pipeline_mode = #tpu.pipeline_mode<synchronous>, transform_indices = @transform_5, window_bounds = array<i64: 64, 1>}, {transform_indices = @transform_6, window_bounds = array<i64: 1>}, {transform_indices = @transform_7, window_bounds = array<i64: 1, 128>}]} {
    %c0 = arith.constant 0 : index
    %c0_0 = arith.constant 0 : index
    %0 = vector.load %arg1[%c0, %c0_0] : memref<128x16xf32, #tpu.memory_space<vmem>>, vector<128x16xf32>
    %1 = arith.truncf %0 : vector<128x16xf32> to vector<128x16xbf16>
    %c0_1 = arith.constant 0 : index
    %c0_2 = arith.constant 0 : index
    %2 = vector.load %arg2[%c0_1, %c0_2] : memref<64x16xbf16, #tpu.memory_space<vmem>>, vector<64x16xbf16>
    %cst = arith.constant dense<0.000000e+00> : vector<64x128xf32>
    %3 = tpu.matmul %2, %1, %cst {dimension_numbers = #tpu.dot_dimension_numbers<[1], [1], [0], [0], [0, 0, 1, 0], [], []>} : vector<64x16xbf16>, vector<128x16xbf16>, vector<64x128xf32> -> vector<64x128xf32>
    %c0_3 = arith.constant 0 : index
    %c0_4 = arith.constant 0 : index
    %4 = vector.load %arg3[%c0_3, %c0_4] : memref<64x1xf32, #tpu.memory_space<vmem>>, vector<64x1xf32>
    %5 = vector.broadcast %4 : vector<64x1xf32> to vector<64x128xf32>
    %6 = arith.addf %3, %5 : vector<64x128xf32>
    %7 = math.tanh %6 : vector<64x128xf32>
    %c0_5 = arith.constant 0 : index
    %c0_6 = arith.constant 0 : index
    %8 = vector.load %arg4[%c0_5, %c0_6] : memref<64x64xbf16, #tpu.memory_space<vmem>>, vector<64x64xbf16>
    %9 = arith.truncf %7 : vector<64x128xf32> to vector<64x128xbf16>
    %cst_7 = arith.constant dense<0.000000e+00> : vector<64x128xf32>
    %10 = tpu.matmul %8, %9, %cst_7 {dimension_numbers = #tpu.dot_dimension_numbers<[1], [0], [0], [1], [0, 0, 1, 1], [], []>} : vector<64x64xbf16>, vector<64x128xbf16>, vector<64x128xf32> -> vector<64x128xf32>
    %c0_8 = arith.constant 0 : index
    %c0_9 = arith.constant 0 : index
    %11 = vector.load %arg5[%c0_8, %c0_9] : memref<64x1xf32, #tpu.memory_space<vmem>>, vector<64x1xf32>
    %12 = vector.broadcast %11 : vector<64x1xf32> to vector<64x128xf32>
    %13 = arith.addf %10, %12 : vector<64x128xf32>
    %14 = math.tanh %13 : vector<64x128xf32>
    %c0_10 = arith.constant 0 : index
    %c0_11 = arith.constant 0 : index
    %15 = vector.load %arg6[%c0_10, %c0_11] : memref<64x1xf32, #tpu.memory_space<vmem>>, vector<64x1xf32>
    %16 = vector.broadcast %15 : vector<64x1xf32> to vector<64x128xf32>
    %17 = arith.mulf %16, %14 : vector<64x128xf32>
    %cst_12 = arith.constant dense<0.000000e+00> : vector<128xf32>
    %18 = vector.multi_reduction <add>, %17, %cst_12 [0] : vector<64x128xf32> to vector<128xf32>
    %19 = vector.shape_cast %18 : vector<128xf32> to vector<1x128xf32>
    %c0_13 = arith.constant 0 : index
    %20 = memref.load %arg7[%c0_13] : memref<1xf32, #tpu.memory_space<smem>>
    %21 = vector.broadcast %20 : f32 to vector<1x128xf32>
    %22 = arith.addf %19, %21 : vector<1x128xf32>
    %c0_14 = arith.constant 0 : index
    %c0_15 = arith.constant 0 : index
    %23 = vector.load %arg8[%c0_14, %c0_15] : memref<1x128xf32, #tpu.memory_space<vmem>>, vector<1x128xf32>
    tpu.vector_store %arg8[%c0_14, %c0_15], %22 {strides = array<i32>} : memref<1x128xf32, #tpu.memory_space<vmem>>, vector<1x128xf32>,
    return
  }
  func.func @transform_0(%arg0: i32) -> (i32, i32) {
    %c0_i32 = arith.constant 0 : i32
    %c0_i32_0 = arith.constant 0 : i32
    return %arg0, %c0_i32 : i32, i32
  }
  func.func @transform_1(%arg0: i32) -> (i32, i32) {
    %c0_i32 = arith.constant 0 : i32
    %c0_i32_0 = arith.constant 0 : i32
    %c0_i32_1 = arith.constant 0 : i32
    return %c0_i32, %c0_i32_0 : i32, i32
  }
  func.func @transform_2(%arg0: i32) -> (i32, i32) {
    %c0_i32 = arith.constant 0 : i32
    %c0_i32_0 = arith.constant 0 : i32
    %c0_i32_1 = arith.constant 0 : i32
    return %c0_i32, %c0_i32_0 : i32, i32
  }
  func.func @transform_3(%arg0: i32) -> (i32, i32) {
    %c0_i32 = arith.constant 0 : i32
    %c0_i32_0 = arith.constant 0 : i32
    %c0_i32_1 = arith.constant 0 : i32
    return %c0_i32, %c0_i32_0 : i32, i32
  }
  func.func @transform_4(%arg0: i32) -> (i32, i32) {
    %c0_i32 = arith.constant 0 : i32
    %c0_i32_0 = arith.constant 0 : i32
    %c0_i32_1 = arith.constant 0 : i32
    return %c0_i32, %c0_i32_0 : i32, i32
  }
  func.func @transform_5(%arg0: i32) -> (i32, i32) {
    %c0_i32 = arith.constant 0 : i32
    %c0_i32_0 = arith.constant 0 : i32
    %c0_i32_1 = arith.constant 0 : i32
    return %c0_i32, %c0_i32_0 : i32, i32
  }
  func.func @transform_6(%arg0: i32) -> i32 {
    %c0_i32 = arith.constant 0 : i32
    %c0_i32_0 = arith.constant 0 : i32
    return %c0_i32 : i32
  }
  func.func @transform_7(%arg0: i32) -> (i32, i32) {
    %c0_i32 = arith.constant 0 : i32
    %c0_i32_0 = arith.constant 0 : i32
    return %c0_i32, %arg0 : i32, i32
  }
}

</mosaic_0001>

<llo_original>
// kernel: _critic_forward.1
$region0: #{_critic_forward.1}
  #allocation0 [shape = 'u32[]', space=smem, size = 0x4, offset = 0x4, fixed_abs, tag = 'smem constant byte address 0x4 - core index']
  #allocation1 [shape = 'u32[72,128]{1,0:T(1,128)}', space=vmem, size = 0x9000, scoped, tag = 'internal scratch']
  #allocation2 [shape = 'f32[1]{0:T(128)S(6)}', space=smem, size = 0x200, scoped, tag = 'scoped memory for _critic_forward.1']
  %s0 = inlined_call_operand.vmem [shape: f32[128,16], index: 0, kind: input, shape index: {}]
  %s1 = inlined_call_operand.vmem [shape: bf16[64,16], index: 1, kind: input, shape index: {}]
  %s2 = inlined_call_operand.vmem [shape: f32[64,1], index: 2, kind: input, shape index: {}]
  %s3 = inlined_call_operand.vmem [shape: bf16[64,64], index: 3, kind: input, shape index: {}]
  %s4 = inlined_call_operand.vmem [shape: f32[64,1], index: 4, kind: input, shape index: {}]
  %s5 = inlined_call_operand.vmem [shape: f32[64,1], index: 5, kind: input, shape index: {}]
  %s6 = inlined_call_operand.<no memory space> [shape: f32[1], index: 6, kind: input, shape index: {}]
  %s7 = inlined_call_operand.vmem [shape: f32[1,128], index: 7, kind: output, shape index: {}]
  %s8 = sld [smem:[#allocation0]]
  $region38: #{_critic_forward.1} parent=0
    _
  %s10 = ssub.s32 1, %s8
  %s11 = scalar_select 0, %s10, %s8
  %12 = sst [smem:[#allocation2]] %s6
  // Predicated region
  $region2: #{_critic_forward.1} parent=0 // pred_check
    _
  $region3: #{_critic_forward.1} parent=0 // pred_check_branch
    %14 = sbr.rel (0) target = $region5
  $region4: #{_critic_forward.1} parent=0 // pred_region
    _
  $region5: #{_critic_forward.1} parent=0 // pred_fallthru
    _
  // Predicated region
  $region6: #{_critic_forward.1} parent=0 // pred_check
    _
  $region7: #{_critic_forward.1} parent=0 // pred_check_branch
    %16 = sbr.rel (0) target = $region9
  $region8: #{_critic_forward.1} parent=0 // pred_region
    _
  $region9: #{_critic_forward.1} parent=0 // pred_fallthru
    _
  // Predicated region
  $region10: #{_critic_forward.1} parent=0 // pred_check
    _
  $region11: #{_critic_forward.1} parent=0 // pred_check_branch
    %18 = sbr.rel (0) target = $region13
  $region12: #{_critic_forward.1} parent=0 // pred_region
    _
  $region13: #{_critic_forward.1} parent=0 // pred_fallthru
    _
  // Predicated region
  $region14: #{_critic_forward.1} parent=0 // pred_check
    _
  $region15: #{_critic_forward.1} parent=0 // pred_check_branch
    %20 = sbr.rel (0) target = $region17
  $region16: #{_critic_forward.1} parent=0 // pred_region
    _
  $region17: #{_critic_forward.1} parent=0 // pred_fallthru
    _
  // Predicated region
  $region18: #{_critic_forward.1} parent=0 // pred_check
    _
  $region19: #{_critic_forward.1} parent=0 // pred_check_branch
    %22 = sbr.rel (0) target = $region21
  $region20: #{_critic_forward.1} parent=0 // pred_region
    _
  $region21: #{_critic_forward.1} parent=0 // pred_fallthru
    _
  // Predicated region
  $region22: #{_critic_forward.1} parent=0 // pred_check
    _
  $region23: #{_critic_forward.1} parent=0 // pred_check_branch
    %24 = sbr.rel (0) target = $region25
  $region24: #{_critic_forward.1} parent=0 // pred_region
    _
  $region25: #{_critic_forward.1} parent=0 // pred_fallthru
    _
  // Predicated region
  $region26: #{_critic_forward.1} parent=0 // pred_check
    _
  $region27: #{_critic_forward.1} parent=0 // pred_check_branch
    %26 = sbr.rel (0) target = $region29
  $region28: #{_critic_forward.1} parent=0 // pred_region
    _
  $region29: #{_critic_forward.1} parent=0 // pred_fallthru
    _
  %v28 = vld [vmem:[%s0] sm:$0xff]
  %v29 = vld [vmem:[%s0 + $0x8] sm:$0xff]
  %v30 = vld [vmem:[%s0 + $0x10] sm:$0xff]
  %v31 = vld [vmem:[%s0 + $0x18] sm:$0xff]
  %v32 = vld [vmem:[%s0 + $0x20] sm:$0xff]
  %v33 = vld [vmem:[%s0 + $0x28] sm:$0xff]
  %v34 = vld [vmem:[%s0 + $0x30] sm:$0xff]
  %v35 = vld [vmem:[%s0 + $0x38] sm:$0xff]
  %v36 = vld [vmem:[%s0 + $0x40] sm:$0xff]
  %v37 = vld [vmem:[%s0 + $0x48] sm:$0xff]
  %v38 = vld [vmem:[%s0 + $0x50] sm:$0xff]
  %v39 = vld [vmem:[%s0 + $0x58] sm:$0xff]
  %v40 = vld [vmem:[%s0 + $0x60] sm:$0xff]
  %v41 = vld [vmem:[%s0 + $0x68] sm:$0xff]
  %v42 = vld [vmem:[%s0 + $0x70] sm:$0xff]
  %v43 = vld [vmem:[%s0 + $0x78] sm:$0xff]
  %v44 = vpack.c.bf16 %v29, %v28
  %v45 = vpack.c.bf16 %v31, %v30
  %v46 = vpack.c.bf16 %v33, %v32
  %v47 = vpack.c.bf16 %v35, %v34
  %v48 = vpack.c.bf16 %v37, %v36
  %v49 = vpack.c.bf16 %v39, %v38
  %v50 = vpack.c.bf16 %v41, %v40
  %v51 = vpack.c.bf16 %v43, %v42
  %v52 = vld [vmem:[%s1] sm:$0xf]
  %v53 = vld [vmem:[%s1 + $0x4] sm:$0xf]
  %v54 = vld [vmem:[%s1 + $0x8] sm:$0xf]
  %v55 = vld [vmem:[%s1 + $0xc] sm:$0xf]
  %v56 = vld [vmem:[%s1 + $0x10] sm:$0xf]
  %v57 = vld [vmem:[%s1 + $0x14] sm:$0xf]
  %v58 = vld [vmem:[%s1 + $0x18] sm:$0xf]
  %v59 = vld [vmem:[%s1 + $0x1c] sm:$0xf]
  %v60 = vld [vmem:[%s2] sm:$0xff]
  %v61 = vld [vmem:[%s2 + $0x8] sm:$0xff]
  %v62 = vld [vmem:[%s2 + $0x10] sm:$0xff]
  %v63 = vld [vmem:[%s2 + $0x18] sm:$0xff]
  %v64 = vld [vmem:[%s2 + $0x20] sm:$0xff]
  %v65 = vld [vmem:[%s2 + $0x28] sm:$0xff]
  %v66 = vld [vmem:[%s2 + $0x30] sm:$0xff]
  %v67 = vld [vmem:[%s2 + $0x38] sm:$0xff]
  %69 = vset.pattern.permute.xlu0 0
  %70 = vperm.xlu0 %69, %v60
  %v71 = vpop.permute.xlu0 %70
  %74 = vset.pattern.permute.xlu0 0
  %75 = vperm.xlu0 %74, %v61
  %v76 = vpop.permute.xlu0 %75
  %79 = vset.pattern.permute.xlu0 0
  %80 = vperm.xlu0 %79, %v62
  %v81 = vpop.permute.xlu0 %80
  %84 = vset.pattern.permute.xlu0 0
  %85 = vperm.xlu0 %84, %v63
  %v86 = vpop.permute.xlu0 %85
  %89 = vset.pattern.permute.xlu0 0
  %90 = vperm.xlu0 %89, %v64
  %v91 = vpop.permute.xlu0 %90
  %94 = vset.pattern.permute.xlu0 0
  %95 = vperm.xlu0 %94, %v65
  %v96 = vpop.permute.xlu0 %95
  %99 = vset.pattern.permute.xlu0 0
  %100 = vperm.xlu0 %99, %v66
  %v101 = vpop.permute.xlu0 %100
  %104 = vset.pattern.permute.xlu0 0
  %105 = vperm.xlu0 %104, %v67
  %v106 = vpop.permute.xlu0 %105
  %v116 = vunpack.c.l.b16 %v52
  %v117 = vunpack.c.l.b16 %v53
  %v118 = vunpack.c.l.b16 %v54
  %v119 = vunpack.c.l.b16 %v55
  %v120 = vunpack.c.l.b16 %v56
  %v121 = vunpack.c.l.b16 %v57
  %v122 = vunpack.c.l.b16 %v58
  %v123 = vunpack.c.l.b16 %v59
  %v124 = vpack.c.b16 %v117, %v116
  %v125 = vpack.c.b16 %v119, %v118
  %v126 = vpack.c.b16 %v121, %v120
  %v127 = vpack.c.b16 %v123, %v122
  %vm128 = vcmask 130048
  %v130 = vsel %vm128, %v124, 0
  %v133 = vsel %vm128, %v125, 0
  %v136 = vsel %vm128, %v126, 0
  %v139 = vsel %vm128, %v127, 0
  %v142 = vsel %vm128, %v44, 0
  %v145 = vsel %vm128, %v45, 0
  %v148 = vsel %vm128, %v46, 0
  %v151 = vsel %vm128, %v47, 0
  %v154 = vsel %vm128, %v48, 0
  %v157 = vsel %vm128, %v49, 0
  %v160 = vsel %vm128, %v50, 0
  %v163 = vsel %vm128, %v51, 0
  %165 = vmatpush.bf16.xpose.msra.mxu0 %v163
  %166 = vmatpush.bf16.xpose.msra.mxu0 %v160
  %167 = vmatpush.bf16.xpose.msra.mxu0 %v157
  %168 = vmatpush.bf16.xpose.msra.mxu0 %v154
  %169 = vmatpush.bf16.xpose.msra.mxu0 %v151
  %170 = vmatpush.bf16.xpose.msra.mxu0 %v148
  %171 = vmatpush.bf16.xpose.msra.mxu0 %v145
  %172 = vmatpush.bf16.xpose.msra.mxu0 %v142
  %173 = vmatmul.bf16.gmra.mxu0 %v130
  %v174 = vpop.f32.mrf.mxu0
  %v175 = vadd.f32 %v71, %v174
  %v176 = vpop.f32.mrf.mxu0
  %v177 = vadd.f32 %v76, %v176
  %178 = vmatmul.bf16.gmra.mxu0 %v133
  %v179 = vpop.f32.mrf.mxu0
  %v180 = vadd.f32 %v81, %v179
  %v181 = vpop.f32.mrf.mxu0
  %v182 = vadd.f32 %v86, %v181
  %183 = vmatmul.bf16.gmra.mxu0 %v136
  %v184 = vpop.f32.mrf.mxu0
  %v185 = vadd.f32 %v91, %v184
  %v186 = vpop.f32.mrf.mxu0
  %v187 = vadd.f32 %v96, %v186
  %188 = vmatmul.bf16.gmra.mxu0 %v139
  %v189 = vpop.f32.mrf.mxu0
  %v190 = vadd.f32 %v101, %v189
  %v191 = vpop.f32.mrf.mxu0
  %v192 = vadd.f32 %v106, %v191
  %193 = vdwg.mxu0
  %v194 = vtanh.pop %v175
  %v195 = vtanh.pop %v177
  %v196 = vtanh.pop %v180
  %v197 = vtanh.pop %v182
  %v198 = vtanh.pop %v185
  %v199 = vtanh.pop %v187
  %v200 = vtanh.pop %v190
  %v201 = vtanh.pop %v192
  %v202 = vld [vmem:[%s3] sm:$0xf]
  %v203 = vld [vmem:[%s3 + $0x4] sm:$0xf]
  %v204 = vld [vmem:[%s3 + $0x8] sm:$0xf]
  %v205 = vld [vmem:[%s3 + $0xc] sm:$0xf]
  %v206 = vld [vmem:[%s3 + $0x10] sm:$0xf]
  %v207 = vld [vmem:[%s3 + $0x14] sm:$0xf]
  %v208 = vld [vmem:[%s3 + $0x18] sm:$0xf]
  %v209 = vld [vmem:[%s3 + $0x1c] sm:$0xf]
  %v210 = vpack.c.bf16 %v195, %v194
  %v211 = vpack.c.bf16 %v197, %v196
  %v212 = vpack.c.bf16 %v199, %v198
  %v213 = vpack.c.bf16 %v201, %v200
  %v214 = vld [vmem:[%s4] sm:$0xff]
  %v215 = vld [vmem:[%s4 + $0x8] sm:$0xff]
  %v216 = vld [vmem:[%s4 + $0x10] sm:$0xff]
  %v217 = vld [vmem:[%s4 + $0x18] sm:$0xff]
  %v218 = vld [vmem:[%s4 + $0x20] sm:$0xff]
  %v219 = vld [vmem:[%s4 + $0x28] sm:$0xff]
  %v220 = vld [vmem:[%s4 + $0x30] sm:$0xff]
  %v221 = vld [vmem:[%s4 + $0x38] sm:$0xff]
  %223 = vset.pattern.permute.xlu0 0
  %224 = vperm.xlu0 %223, %v214
  %v225 = vpop.permute.xlu0 %224
  %228 = vset.pattern.permute.xlu0 0
  %229 = vperm.xlu0 %228, %v215
  %v230 = vpop.permute.xlu0 %229
  %233 = vset.pattern.permute.xlu0 0
  %234 = vperm.xlu0 %233, %v216
  %v235 = vpop.permute.xlu0 %234
  %238 = vset.pattern.permute.xlu0 0
  %239 = vperm.xlu0 %238, %v217
  %v240 = vpop.permute.xlu0 %239
  %243 = vset.pattern.permute.xlu0 0
  %244 = vperm.xlu0 %243, %v218
  %v245 = vpop.permute.xlu0 %244
  %248 = vset.pattern.permute.xlu0 0
  %249 = vperm.xlu0 %248, %v219
  %v250 = vpop.permute.xlu0 %249
  %253 = vset.pattern.permute.xlu0 0
  %254 = vperm.xlu0 %253, %v220
  %v255 = vpop.permute.xlu0 %254
  %258 = vset.pattern.permute.xlu0 0
  %259 = vperm.xlu0 %258, %v221
  %v260 = vpop.permute.xlu0 %259
  %v270 = vunpack.c.l.b16 %v202
  %v271 = vunpack.c.l.b16 %v203
  %v272 = vunpack.c.l.b16 %v204
  %v273 = vunpack.c.l.b16 %v205
  %v274 = vunpack.c.l.b16 %v206
  %v275 = vunpack.c.l.b16 %v207
  %v276 = vunpack.c.l.b16 %v208
  %v277 = vunpack.c.l.b16 %v209
  %v278 = vpack.c.b16 %v271, %v270
  %v279 = vpack.c.b16 %v273, %v272
  %v280 = vpack.c.b16 %v275, %v274
  %v281 = vpack.c.b16 %v277, %v276
  %vm282 = vcmask 523264
  %v284 = vsel %vm282, %v278, 0
  %v287 = vsel %vm282, %v279, 0
  %v290 = vsel %vm282, %v280, 0
  %v293 = vsel %vm282, %v281, 0
  %295 = vmatpush.bf16.msra.mxu0 0
  %296 = vmatpush.bf16.msra.mxu0 0
  %297 = vmatpush.bf16.msra.mxu0 0
  %298 = vmatpush.bf16.msra.mxu0 0
  %299 = vmatpush.bf16.msra.mxu0 %v213
  %300 = vmatpush.bf16.msra.mxu0 %v212
  %301 = vmatpush.bf16.msra.mxu0 %v211
  %302 = vmatpush.bf16.msra.mxu0 %v210
  %303 = vmatmul.bf16.gmra.mxu0 %v284
  %v304 = vpop.f32.mrf.mxu0
  %v305 = vadd.f32 %v225, %v304
  %v306 = vpop.f32.mrf.mxu0
  %v307 = vadd.f32 %v230, %v306
  %308 = vmatmul.bf16.gmra.mxu0 %v287
  %v309 = vpop.f32.mrf.mxu0
  %v310 = vadd.f32 %v235, %v309
  %v311 = vpop.f32.mrf.mxu0
  %v312 = vadd.f32 %v240, %v311
  %313 = vmatmul.bf16.gmra.mxu0 %v290
  %v314 = vpop.f32.mrf.mxu0
  %v315 = vadd.f32 %v245, %v314
  %v316 = vpop.f32.mrf.mxu0
  %v317 = vadd.f32 %v250, %v316
  %318 = vmatmul.bf16.gmra.mxu0 %v293
  %v319 = vpop.f32.mrf.mxu0
  %v320 = vadd.f32 %v255, %v319
  %v321 = vpop.f32.mrf.mxu0
  %v322 = vadd.f32 %v260, %v321
  %323 = vdwg.mxu0
  %v324 = vtanh.pop %v305
  %v325 = vtanh.pop %v307
  %v326 = vtanh.pop %v310
  %v327 = vtanh.pop %v312
  %v328 = vtanh.pop %v315
  %v329 = vtanh.pop %v317
  %v330 = vtanh.pop %v320
  %v331 = vtanh.pop %v322
  %v332 = vld [vmem:[%s5] sm:$0xff]
  %v333 = vld [vmem:[%s5 + $0x8] sm:$0xff]
  %v334 = vld [vmem:[%s5 + $0x10] sm:$0xff]
  %v335 = vld [vmem:[%s5 + $0x18] sm:$0xff]
  %v336 = vld [vmem:[%s5 + $0x20] sm:$0xff]
  %v337 = vld [vmem:[%s5 + $0x28] sm:$0xff]
  %v338 = vld [vmem:[%s5 + $0x30] sm:$0xff]
  %v339 = vld [vmem:[%s5 + $0x38] sm:$0xff]
  %341 = vset.pattern.permute.xlu0 0
  %342 = vperm.xlu0 %341, %v332
  %v343 = vpop.permute.xlu0 %342
  %346 = vset.pattern.permute.xlu0 0
  %347 = vperm.xlu0 %346, %v333
  %v348 = vpop.permute.xlu0 %347
  %351 = vset.pattern.permute.xlu0 0
  %352 = vperm.xlu0 %351, %v334
  %v353 = vpop.permute.xlu0 %352
  %356 = vset.pattern.permute.xlu0 0
  %357 = vperm.xlu0 %356, %v335
  %v358 = vpop.permute.xlu0 %357
  %361 = vset.pattern.permute.xlu0 0
  %362 = vperm.xlu0 %361, %v336
  %v363 = vpop.permute.xlu0 %362
  %366 = vset.pattern.permute.xlu0 0
  %367 = vperm.xlu0 %366, %v337
  %v368 = vpop.permute.xlu0 %367
  %371 = vset.pattern.permute.xlu0 0
  %372 = vperm.xlu0 %371, %v338
  %v373 = vpop.permute.xlu0 %372
  %376 = vset.pattern.permute.xlu0 0
  %377 = vperm.xlu0 %376, %v339
  %v378 = vpop.permute.xlu0 %377
  %v380 = vmul.f32 %v343, %v324
  %v381 = vmul.f32 %v348, %v325
  %v382 = vmul.f32 %v353, %v326
  %v383 = vmul.f32 %v358, %v327
  %v384 = vmul.f32 %v363, %v328
  %v385 = vmul.f32 %v368, %v329
  %v386 = vmul.f32 %v373, %v330
  %v387 = vmul.f32 %v378, %v331
  %v388 = vadd.f32 %v380, %v381
  %v389 = vadd.f32 %v388, %v382
  %v390 = vadd.f32 %v389, %v383
  %v391 = vadd.f32 %v390, %v384
  %v392 = vadd.f32 %v391, %v385
  %v393 = vadd.f32 %v392, %v386
  %v394 = vadd.f32 %v393, %v387
  %v395 = vrot.slane %v394, 4
  %v396 = vadd.f32 %v394, %v395
  %v397 = vrot.slane %v396, 2
  %v398 = vadd.f32 %v396, %v397
  %v399 = vrot.slane %v398, 1
  %v400 = vadd.f32 %v398, %v399
  %s401 = sld [smem:[#allocation2]]
  %v402 = vstv %s401
  %v403 = vadd.f32 %v400, %v402
  %404 = vst [vmem:[%s7] sm:$0x1] %v403
  // Predicated region
  $region30: #{_critic_forward.1} parent=0 // pred_check
    _
  $region31: #{_critic_forward.1} parent=0 // pred_check_branch
    %406 = sbr.rel (0) target = $region33
  $region32: #{_critic_forward.1} parent=0 // pred_region
    _
  $region33: #{_critic_forward.1} parent=0 // pred_fallthru
    _
  // Predicated region
  $region34: #{_critic_forward.1} parent=0 // pred_check
    _
  $region35: #{_critic_forward.1} parent=0 // pred_check_branch
    %408 = sbr.rel (0) target = $region37
  $region36: #{_critic_forward.1} parent=0 // pred_region
    _
  $region37: #{_critic_forward.1} parent=0 // pred_fallthru
    _

</llo_original>
